<compile_context>
chip_gen: v6e
topology: v6e:2x2x1
jax: 0.10.0
libtpu: 0.0.40
codegen_flags: <defaults>
</compile_context>

<pallas_src>
import jax
import jax.numpy as jnp
from jax.experimental import pallas as pl
from jax.experimental.pallas import tpu as pltpu

# ----- hyper-parameters consistent with the module __init__ -----
N = 8            # batch inside one forward call
X_DIM = 16
S_DIM = 2        # one-hot sensitive attribute
Y_DIM = 1
Z_DIM = 8
Z1_ENC_DIM = 32
X_DEC_DIM = 32
NCE_SIZE = 16
S_NUM = 2
BETA = 0.01      # == lr in the torch module (self.beta = lr)
LAMBDA = 2.0     # self.lambda_

LANES = 128
IN_DIM = X_DIM + S_DIM                      # 18

# ---------------- data slab layout: one (8, 128) f32 block per instance -----
EPS_OFF = X_DIM + S_DIM + Y_DIM             # 19: eps occupies cols [19, 27)
CAT_COL = EPS_OFF + Z_DIM                   # 27: per-sample category id (float)
CROW_OFF = CAT_COL + 1                      # 28: row 0, lanes [28, 36): cat of sample j
DATA_ROWS = N                               # 8 rows (one sublane tile)

# ---------------- fused weight blocks ----------------
W1_COLS = Z1_ENC_DIM + NCE_SIZE             # 48: [enc1_w | fx_w1(zero-padded rows)]
W2_COLS = 2 * Z_DIM                         # 16: [logvar_w | mu_w]
W3_COLS = X_DEC_DIM + Z_DIM                 # 40: [dy_w1 | fz_w]
W4_ROWS = X_DEC_DIM + NCE_SIZE              # 48: blockdiag(dy_w2, fx_w2)
W4_COLS = Y_DIM + Z_DIM                     # 9
WS_COLS = S_NUM * Z_DIM                     # 16: column-stacked w_s

# lane-packed slab layout: name -> (row_off, lane_off, rows, cols)
W_LAYOUT = {
    "w4": (0, 0, W4_ROWS, W4_COLS),         # rows 0:48,  lanes 0:9
    "w2": (0, 16, Z1_ENC_DIM, W2_COLS),     # rows 0:32,  lanes 16:32
    "w1": (0, 32, IN_DIM, W1_COLS),         # rows 0:18,  lanes 32:80
    "w3": (0, 80, Z_DIM, W3_COLS),          # rows 0:8,   lanes 80:120
    "ws": (8, 80, Z_DIM, WS_COLS),          # rows 8:16,  lanes 80:96
    "b1": (48, 0, 1, W1_COLS),              # [enc1_b | fx_b1]
    "b2": (49, 0, 1, W2_COLS),              # [lv_b   | mu_b]
    "b3": (50, 0, 1, W3_COLS),              # [dy_b1  | fz_b]
    "b4": (51, 0, 1, W4_COLS),              # [dy_b2  | fx_b2]
}
W_ROWS = 56                                 # 56x128 f32 -> 28 KiB slab


# ---------------- kernel helpers ----------------
def _blk(w_ref, name):
    r, c, nr, nc = W_LAYOUT[name]
    return w_ref[r:r + nr, c:c + nc]


def _softplus(x):
    # numerically stable softplus, matches torch.nn.functional.softplus
    return jnp.maximum(x, 0.0) + jnp.log1p(jnp.exp(-jnp.abs(x)))


def _matmul_bt(a, b):
    # a @ b.T on the MXU without materializing a transpose
    return jax.lax.dot_general(
        a, b, (((1,), (1,)), ((), ())), preferred_element_type=jnp.float32)


# ---------------- fused forward kernel (one grid step == one forward call) ----
def cvae_kernel(data_ref, w_ref, out_ref):
    f32 = jnp.float32

    x_s = data_ref[:, 0:IN_DIM]                              # == cat([x, s], 1)
    y = data_ref[:, IN_DIM:IN_DIM + Y_DIM]
    eps = data_ref[:, EPS_OFF:EPS_OFF + Z_DIM]
    c_col = data_ref[:, CAT_COL:CAT_COL + 1]                 # (N, 1) category id
    c_row = data_ref[0:1, CROW_OFF:CROW_OFF + N]             # (1, N) category id

    # --- fused enc1 + f_x first layer (fx_w1 rows for s are zero) -------------
    h1 = jnp.dot(x_s, _blk(w_ref, "w1"),
                 preferred_element_type=f32) + _blk(w_ref, "b1")
    h = h1[:, 0:Z1_ENC_DIM]                       # NO activation (per reference)
    fx_h = jnp.maximum(h1[:, Z1_ENC_DIM:W1_COLS], 0.0)

    # --- fused [logvar | mu] heads -------------------------------------------
    lm = jnp.dot(h, _blk(w_ref, "w2"),
                 preferred_element_type=f32) + _blk(w_ref, "b2")
    std = jnp.exp(0.5 * lm[:, 0:Z_DIM])          # torch's "logvar" = exp(0.5*raw)
    mu = lm[:, Z_DIM:2 * Z_DIM]
    z1 = eps * mu + std                          # reparameterization as in reference

    # --- fused decoder_y hidden + f_z ----------------------------------------
    h3 = jnp.dot(z1, _blk(w_ref, "w3"),
                 preferred_element_type=f32) + _blk(w_ref, "b3")
    hy = jnp.maximum(h3[:, 0:X_DEC_DIM], 0.0)
    f_z = h3[:, X_DEC_DIM:W3_COLS]

    # --- fused decoder_y output head + f_x second layer (block-diag weights) --
    h4_in = jnp.concatenate([hy, fx_h], axis=1)               # (N, 48)
    h4 = jnp.dot(h4_in, _blk(w_ref, "w4"),
                 preferred_element_type=f32) + _blk(w_ref, "b4")
    y_dec = jax.nn.sigmoid(h4[:, 0:Y_DIM])
    f_x = h4[:, Y_DIM:W4_COLS]

    # --- VFAELoss: only the supervised BCE term survives ----------------------
    log_p = jnp.maximum(jnp.log(y_dec), -100.0)               # BCELoss clamps logs
    log_1mp = jnp.maximum(jnp.log(1.0 - y_dec), -100.0)
    bce = jnp.mean(-(y * log_p + (1.0 - y) * log_1mp))

    # --- kl_gaussian (computed on std, exactly as the torch code) -------------
    kl = 0.5 * jnp.sum(-std - 1.0 + jnp.exp(std) + mu * mu,
                       axis=1, keepdims=True)                 # (N, 1)

    # --- CPC / NCE estimate ----------------------------------------------------
    fxW = jnp.dot(f_x, _blk(w_ref, "ws"),
                  preferred_element_type=f32)                 # (N, S_NUM*Z_DIM)
    A = jnp.where(c_col < 0.5,
                  fxW[:, 0:Z_DIM], fxW[:, Z_DIM:2 * Z_DIM])   # f_x[i] @ w_s[c_i]

    T = _softplus(jnp.sum(A * f_z, axis=1, keepdims=True))    # positive pair (N,1)
    M = _matmul_bt(A, f_z)                                    # (N, N)
    same_cat = (jnp.abs(c_col - c_row) < 0.5).astype(f32)     # VPU-only mask
    neg_T = jnp.sum(same_cat * _softplus(M), axis=1, keepdims=True)
    nce = jnp.log(T + 1e-16) - jnp.log(neg_T + 1e-16)         # (N, 1)

    # --- final outputs, packed into one lane-dense slab ------------------------
    mi_sz = BETA * kl - LAMBDA * nce
    vae_loss = bce + jnp.mean(mi_sz)

    lane = jax.lax.broadcasted_iota(jnp.int32, (N, LANES), 1)
    out_ref[...] = jnp.where(lane == 0, mi_sz,
                    jnp.where(lane == 1, y_dec,
                     jnp.where(lane == 2, vae_loss, 0.0)))


# ---------------- parameter construction & packing ----------------
def make_params(key):
    ks = jax.random.split(key, 9)

    def lin(k, fan_in, fan_out):
        kw, kb = jax.random.split(k)
        bound = 1.0 / jnp.sqrt(float(fan_in))
        w = jax.random.uniform(kw, (fan_in, fan_out), jnp.float32, -bound, bound)
        b = jax.random.uniform(kb, (1, fan_out), jnp.float32, -bound, bound)
        return w, b

    p = {}
    p['enc1_w'], p['enc1_b'] = lin(ks[0], IN_DIM, Z1_ENC_DIM)
    p['lv_w'], p['lv_b'] = lin(ks[1], Z1_ENC_DIM, Z_DIM)
    p['mu_w'], p['mu_b'] = lin(ks[2], Z1_ENC_DIM, Z_DIM)
    p['dy_w1'], p['dy_b1'] = lin(ks[3], Z_DIM, X_DEC_DIM)
    p['dy_w2'], p['dy_b2'] = lin(ks[4], X_DEC_DIM, Y_DIM)
    p['fx_w1'], p['fx_b1'] = lin(ks[5], X_DIM, NCE_SIZE)
    p['fx_w2'], p['fx_b2'] = lin(ks[6], NCE_SIZE, Z_DIM)
    p['fz_w'], p['fz_b'] = lin(ks[7], Z_DIM, Z_DIM)
    p['w_s'] = jax.random.normal(ks[8], (S_NUM, Z_DIM, Z_DIM), jnp.float32)
    # NOTE: encoder_z2 / decoder_z1 exist in __init__ but are unused by forward;
    # decoder_x is computed by the reference forward but does not affect any of
    # the three returned values, so its weights are neither packed nor loaded.
    return p


def pack_weights(p):
    slab = jnp.zeros((W_ROWS, LANES), jnp.float32)

    def put(slab, name, arr):
        r, c, nr, nc = W_LAYOUT[name]
        assert arr.shape == (nr, nc), (name, arr.shape, (nr, nc))
        return slab.at[r:r + nr, c:c + nc].set(arr)

    # [enc1_w | fx_w1 padded with zero rows for the s columns of x_s]
    fx_w1_pad = jnp.concatenate(
        [p["fx_w1"], jnp.zeros((S_DIM, NCE_SIZE), jnp.float32)], axis=0)
    w1 = jnp.concatenate([p["enc1_w"], fx_w1_pad], axis=1)            # (18, 48)
    w2 = jnp.concatenate([p["lv_w"], p["mu_w"]], axis=1)              # (32, 16)
    w3 = jnp.concatenate([p["dy_w1"], p["fz_w"]], axis=1)             # (8, 40)
    w4 = jnp.zeros((W4_ROWS, W4_COLS), jnp.float32)                   # block-diag
    w4 = w4.at[0:X_DEC_DIM, 0:Y_DIM].set(p["dy_w2"])
    w4 = w4.at[X_DEC_DIM:W4_ROWS, Y_DIM:W4_COLS].set(p["fx_w2"])
    ws = jnp.concatenate([p["w_s"][c] for c in range(S_NUM)], axis=1)  # (8, 16)

    b1 = jnp.concatenate([p["enc1_b"], p["fx_b1"]], axis=1)
    b2 = jnp.concatenate([p["lv_b"], p["mu_b"]], axis=1)
    b3 = jnp.concatenate([p["dy_b1"], p["fz_b"]], axis=1)
    b4 = jnp.concatenate([p["dy_b2"], p["fx_b2"]], axis=1)

    for name, arr in [("w1", w1), ("w2", w2), ("w3", w3), ("w4", w4), ("ws", ws),
                      ("b1", b1), ("b2", b2), ("b3", b3), ("b4", b4)]:
        slab = put(slab, name, arr)
    return slab


def pack_data(inputs, eps):
    # Layout plumbing only: per instance one (8, 128) slab holding x|s|y|eps|cat
    # plus a category-per-lane strip in row 0 lanes 28:36 (so the kernel never
    # needs an in-kernel transpose or an s @ s.T MXU push).
    b, n, _ = inputs.shape
    s = inputs[:, :, X_DIM:X_DIM + S_DIM]
    cat = jnp.argmax(s, axis=-1).astype(jnp.float32)          # (B, N)
    data = jnp.zeros((b, n, LANES), jnp.float32)
    data = data.at[:, :, 0:inputs.shape[-1]].set(inputs)
    data = data.at[:, :, EPS_OFF:EPS_OFF + Z_DIM].set(eps)
    data = data.at[:, :, CAT_COL].set(cat)
    data = data.at[:, 0, CROW_OFF:CROW_OFF + n].set(cat)
    return data.reshape(b * n, LANES)


def cvae_forward(inputs, eps, w_slab):
    """inputs: (B, N, X+S+Y); eps: (B, N, Z). Each of the B instances is one
    independent forward() call of the torch module; they are batched over a
    1-D grid so the weight slab is DMA'd once and stays VMEM-resident."""
    b = inputs.shape[0]
    data = pack_data(inputs, eps)

    flops = 40_000 * b            # ~37K MXU flops + elementwise per instance
    transcendentals = 256 * b
    bytes_accessed = b * (2 * N * LANES * 4) + W_ROWS * LANES * 4

    out = pl.pallas_call(
        cvae_kernel,
        out_shape=jax.ShapeDtypeStruct((b * N, LANES), jnp.float32),
        grid_spec=pltpu.PrefetchScalarGridSpec(
            num_scalar_prefetch=0,
            grid=(b,),
            in_specs=[pl.BlockSpec((N, LANES), lambda i: (i, 0)),
                      pl.BlockSpec((W_ROWS, LANES), lambda i: (0, 0))],
            out_specs=pl.BlockSpec((N, LANES), lambda i: (i, 0))),
        compiler_params=pltpu.CompilerParams(
            dimension_semantics=("parallel",)),
        cost_estimate=pl.CostEstimate(flops=flops,
                                      transcendentals=transcendentals,
                                      bytes_accessed=bytes_accessed),
    )(data, w_slab)

    out = out.reshape(b, N, LANES)
    vae_loss = out[:, 0, 2]                 # (B,)
    mi_sz = out[:, :, 0:1]                  # (B, N, 1)
    y_prob = out[:, :, 1]                   # (B, N) == y_decoded.squeeze()
    return vae_loss, mi_sz, y_prob


# ---------------- pure-JAX reference (same bug-for-bug semantics) ----------------
def cvae_reference(inputs, eps, p):
    x = inputs[:, 0:X_DIM]
    s = inputs[:, X_DIM:X_DIM + S_DIM]
    y = inputs[:, X_DIM + S_DIM:X_DIM + S_DIM + Y_DIM]
    x_s = jnp.concatenate([x, s], axis=1)

    h = x_s @ p['enc1_w'] + p['enc1_b'][0]
    std = jnp.exp(0.5 * (h @ p['lv_w'] + p['lv_b'][0]))
    mu = h @ p['mu_w'] + p['mu_b'][0]
    z1 = eps * mu + std

    hy = jax.nn.relu(z1 @ p['dy_w1'] + p['dy_b1'][0])
    y_dec = jax.nn.sigmoid(hy @ p['dy_w2'] + p['dy_b2'][0])

    log_p = jnp.maximum(jnp.log(y_dec), -100.0)
    log_1mp = jnp.maximum(jnp.log(1.0 - y_dec), -100.0)
    bce = jnp.mean(-(y * log_p + (1.0 - y) * log_1mp))

    kl = 0.5 * jnp.sum(-std - 1.0 + jnp.exp(std) + mu * mu, axis=1)

    c = jnp.argmax(s, axis=1)
    fx_h = jax.nn.relu(x @ p['fx_w1'] + p['fx_b1'][0])
    f_x = fx_h @ p['fx_w2'] + p['fx_b2'][0]
    f_z = z1 @ p['fz_w'] + p['fz_b'][0]
    A = jnp.einsum('nd,nde->ne', f_x, p['w_s'][c])
    T = jax.nn.softplus(jnp.sum(A * f_z, axis=1))
    M = jax.nn.softplus(A @ f_z.T)
    same = (c[:, None] == c[None, :]).astype(jnp.float32)
    neg_T = jnp.sum(same * M, axis=1)
    nce = jnp.log(T + 1e-16) - jnp.log(neg_T + 1e-16)

    mi_sz = BETA * kl - LAMBDA * nce
    vae_loss = bce + jnp.mean(mi_sz)
    return vae_loss, mi_sz[:, None], y_dec[:, 0]


if __name__ == "__main__":
    key = jax.random.PRNGKey(0)
    kp, kd = jax.random.split(key)
    B = 4                                    # independent forward instances

    kx, ksi, ky, ke = jax.random.split(kd, 4)
    x = jax.random.uniform(kx, (B, N, X_DIM), jnp.float32)
    s_idx = jax.random.randint(ksi, (B, N), 0, S_NUM)
    s_onehot = jax.nn.one_hot(s_idx, S_NUM, dtype=jnp.float32)
    y = jax.random.bernoulli(ky, 0.5, (B, N, Y_DIM)).astype(jnp.float32)
    inputs = jnp.concatenate([x, s_onehot, y], axis=-1)      # (B, N, x+s+y)
    eps = jax.random.normal(ke, (B, N, Z_DIM), jnp.float32)  # reparam noise

    params = make_params(kp)
    w_slab = pack_weights(params)

    fwd = jax.jit(cvae_forward)
    vae_loss, mi_sz, y_prob = fwd(inputs, eps, w_slab)
    jax.block_until_ready((vae_loss, mi_sz, y_prob))

    assert vae_loss.shape == (B,)
    assert mi_sz.shape == (B, N, 1)
    assert y_prob.shape == (B, N)
    assert bool(jnp.all(jnp.isfinite(vae_loss)))

    # pure-JAX reference check (same semantics, per instance)
    ref_loss, ref_mi, ref_yp = jax.vmap(
        lambda i, e: cvae_reference(i, e, params))(inputs, eps)
    assert jnp.allclose(vae_loss, ref_loss, rtol=1e-2, atol=1e-3)
    assert jnp.allclose(mi_sz, ref_mi, rtol=1e-2, atol=1e-3)
    assert jnp.allclose(y_prob, ref_yp, rtol=1e-2, atol=1e-3)

    print("KERNEL_OK")
</pallas_src>

<mosaic_0001>
module attributes {stable_mosaic.version = 11 : i64} {
  func.func @cvae_kernel(%arg0: i32, %arg1: memref<8x128xf32, #tpu.memory_space<vmem>>, %arg2: memref<56x128xf32, #tpu.memory_space<vmem>>, %arg3: memref<8x128xf32, #tpu.memory_space<vmem>>) attributes {dimension_semantics = [#tpu.dimension_semantics<parallel>], iteration_bounds = array<i64: 4>, scalar_prefetch = 0 : i64, scratch_operands = 0 : i64, tpu.core_type = #tpu.core_type<tc>, window_params = [{transform_indices = @transform_0, window_bounds = array<i64: 8, 128>}, {pipeline_mode = #tpu.pipeline_mode<synchronous>, transform_indices = @transform_1, window_bounds = array<i64: 56, 128>}, {transform_indices = @transform_2, window_bounds = array<i64: 8, 128>}]} {
    %c0 = arith.constant 0 : index
    %c0_0 = arith.constant 0 : index
    %0 = vector.load %arg1[%c0, %c0_0] : memref<8x128xf32, #tpu.memory_space<vmem>>, vector<8x18xf32>
    %c0_1 = arith.constant 0 : index
    %c18 = arith.constant 18 : index
    %1 = vector.load %arg1[%c0_1, %c18] : memref<8x128xf32, #tpu.memory_space<vmem>>, vector<8x1xf32>
    %c0_2 = arith.constant 0 : index
    %c19 = arith.constant 19 : index
    %2 = vector.load %arg1[%c0_2, %c19] : memref<8x128xf32, #tpu.memory_space<vmem>>, vector<8x8xf32>
    %c0_3 = arith.constant 0 : index
    %c27 = arith.constant 27 : index
    %3 = vector.load %arg1[%c0_3, %c27] : memref<8x128xf32, #tpu.memory_space<vmem>>, vector<8x1xf32>
    %c0_4 = arith.constant 0 : index
    %c28 = arith.constant 28 : index
    %4 = vector.load %arg1[%c0_4, %c28] : memref<8x128xf32, #tpu.memory_space<vmem>>, vector<1x8xf32>
    %c0_5 = arith.constant 0 : index
    %c32 = arith.constant 32 : index
    %5 = vector.load %arg2[%c0_5, %c32] : memref<56x128xf32, #tpu.memory_space<vmem>>, vector<18x48xf32>
    %cst = arith.constant dense<0.000000e+00> : vector<8x48xf32>
    %6 = tpu.matmul %0, %5, %cst {dimension_numbers = #tpu.dot_dimension_numbers<[1], [0], [0], [1], [0, 0, 1, 1], [], []>} : vector<8x18xf32>, vector<18x48xf32>, vector<8x48xf32> -> vector<8x48xf32>
    %c48 = arith.constant 48 : index
    %c0_6 = arith.constant 0 : index
    %7 = vector.load %arg2[%c48, %c0_6] : memref<56x128xf32, #tpu.memory_space<vmem>>, vector<1x48xf32>
    %8 = vector.broadcast %7 : vector<1x48xf32> to vector<8x48xf32>
    %9 = arith.addf %6, %8 : vector<8x48xf32>
    %10 = vector.extract_strided_slice %9 {offsets = [0, 0], sizes = [8, 32], strides = [1, 1]} : vector<8x48xf32> to vector<8x32xf32>
    %11 = vector.extract_strided_slice %9 {offsets = [0, 32], sizes = [8, 16], strides = [1, 1]} : vector<8x48xf32> to vector<8x16xf32>
    %cst_7 = arith.constant 0.000000e+00 : f32
    %12 = vector.broadcast %cst_7 : f32 to vector<8x16xf32>
    %13 = arith.maximumf %11, %12 : vector<8x16xf32>
    %c0_8 = arith.constant 0 : index
    %c16 = arith.constant 16 : index
    %14 = vector.load %arg2[%c0_8, %c16] : memref<56x128xf32, #tpu.memory_space<vmem>>, vector<32x16xf32>
    %cst_9 = arith.constant dense<0.000000e+00> : vector<8x16xf32>
    %15 = tpu.matmul %10, %14, %cst_9 {dimension_numbers = #tpu.dot_dimension_numbers<[1], [0], [0], [1], [0, 0, 1, 1], [], []>} : vector<8x32xf32>, vector<32x16xf32>, vector<8x16xf32> -> vector<8x16xf32>
    %c49 = arith.constant 49 : index
    %c0_10 = arith.constant 0 : index
    %16 = vector.load %arg2[%c49, %c0_10] : memref<56x128xf32, #tpu.memory_space<vmem>>, vector<1x16xf32>
    %17 = vector.broadcast %16 : vector<1x16xf32> to vector<8x16xf32>
    %18 = arith.addf %15, %17 : vector<8x16xf32>
    %19 = vector.extract_strided_slice %18 {offsets = [0, 0], sizes = [8, 8], strides = [1, 1]} : vector<8x16xf32> to vector<8x8xf32>
    %cst_11 = arith.constant 5.000000e-01 : f32
    %20 = vector.broadcast %cst_11 : f32 to vector<8x8xf32>
    %21 = arith.mulf %20, %19 : vector<8x8xf32>
    %22 = math.exp %21 : vector<8x8xf32>
    %23 = vector.extract_strided_slice %18 {offsets = [0, 8], sizes = [8, 8], strides = [1, 1]} : vector<8x16xf32> to vector<8x8xf32>
    %24 = arith.mulf %2, %23 : vector<8x8xf32>
    %25 = arith.addf %24, %22 : vector<8x8xf32>
    %c0_12 = arith.constant 0 : index
    %c80 = arith.constant 80 : index
    %26 = vector.load %arg2[%c0_12, %c80] : memref<56x128xf32, #tpu.memory_space<vmem>>, vector<8x40xf32>
    %cst_13 = arith.constant dense<0.000000e+00> : vector<8x40xf32>
    %27 = tpu.matmul %25, %26, %cst_13 {dimension_numbers = #tpu.dot_dimension_numbers<[1], [0], [0], [1], [0, 0, 1, 1], [], []>} : vector<8x8xf32>, vector<8x40xf32>, vector<8x40xf32> -> vector<8x40xf32>
    %c50 = arith.constant 50 : index
    %c0_14 = arith.constant 0 : index
    %28 = vector.load %arg2[%c50, %c0_14] : memref<56x128xf32, #tpu.memory_space<vmem>>, vector<1x40xf32>
    %29 = vector.broadcast %28 : vector<1x40xf32> to vector<8x40xf32>
    %30 = arith.addf %27, %29 : vector<8x40xf32>
    %31 = vector.extract_strided_slice %30 {offsets = [0, 0], sizes = [8, 32], strides = [1, 1]} : vector<8x40xf32> to vector<8x32xf32>
    %cst_15 = arith.constant 0.000000e+00 : f32
    %32 = vector.broadcast %cst_15 : f32 to vector<8x32xf32>
    %33 = arith.maximumf %31, %32 : vector<8x32xf32>
    %34 = vector.extract_strided_slice %30 {offsets = [0, 32], sizes = [8, 8], strides = [1, 1]} : vector<8x40xf32> to vector<8x8xf32>
    %35 = tpu.concatenate %33, %13 in 1 : vector<8x32xf32>, vector<8x16xf32> -> vector<8x48xf32>
    %c0_16 = arith.constant 0 : index
    %c0_17 = arith.constant 0 : index
    %36 = vector.load %arg2[%c0_16, %c0_17] : memref<56x128xf32, #tpu.memory_space<vmem>>, vector<48x9xf32>
    %cst_18 = arith.constant dense<0.000000e+00> : vector<8x9xf32>
    %37 = tpu.matmul %35, %36, %cst_18 {dimension_numbers = #tpu.dot_dimension_numbers<[1], [0], [0], [1], [0, 0, 1, 1], [], []>} : vector<8x48xf32>, vector<48x9xf32>, vector<8x9xf32> -> vector<8x9xf32>
    %c51 = arith.constant 51 : index
    %c0_19 = arith.constant 0 : index
    %38 = vector.load %arg2[%c51, %c0_19] : memref<56x128xf32, #tpu.memory_space<vmem>>, vector<1x9xf32>
    %39 = vector.broadcast %38 : vector<1x9xf32> to vector<8x9xf32>
    %40 = arith.addf %37, %39 : vector<8x9xf32>
    %41 = vector.extract_strided_slice %40 {offsets = [0, 0], sizes = [8, 1], strides = [1, 1]} : vector<8x9xf32> to vector<8x1xf32>
    %42 = arith.negf %41 : vector<8x1xf32>
    %43 = math.exp %42 : vector<8x1xf32>
    %cst_20 = arith.constant 1.000000e+00 : f32
    %44 = vector.broadcast %cst_20 : f32 to vector<8x1xf32>
    %45 = arith.addf %44, %43 : vector<8x1xf32>
    %46 = arith.divf %44, %45 : vector<8x1xf32>
    %47 = vector.extract_strided_slice %40 {offsets = [0, 1], sizes = [8, 8], strides = [1, 1]} : vector<8x9xf32> to vector<8x8xf32>
    %48 = math.log %46 : vector<8x1xf32>
    %cst_21 = arith.constant -1.000000e+02 : f32
    %49 = vector.broadcast %cst_21 : f32 to vector<8x1xf32>
    %50 = arith.maximumf %48, %49 : vector<8x1xf32>
    %cst_22 = arith.constant 1.000000e+00 : f32
    %51 = vector.broadcast %cst_22 : f32 to vector<8x1xf32>
    %52 = arith.subf %51, %46 : vector<8x1xf32>
    %53 = math.log %52 : vector<8x1xf32>
    %cst_23 = arith.constant -1.000000e+02 : f32
    %54 = vector.broadcast %cst_23 : f32 to vector<8x1xf32>
    %55 = arith.maximumf %53, %54 : vector<8x1xf32>
    %56 = arith.mulf %1, %50 : vector<8x1xf32>
    %cst_24 = arith.constant 1.000000e+00 : f32
    %57 = vector.broadcast %cst_24 : f32 to vector<8x1xf32>
    %58 = arith.subf %57, %1 : vector<8x1xf32>
    %59 = arith.mulf %58, %55 : vector<8x1xf32>
    %60 = arith.addf %56, %59 : vector<8x1xf32>
    %cst_25 = arith.constant 0.000000e+00 : f32
    %61 = vector.broadcast %cst_25 : f32 to vector<8x1xf32>
    %62 = arith.subf %61, %60 : vector<8x1xf32>
    %63 = vector.shape_cast %62 : vector<8x1xf32> to vector<1x8x1xf32>
    %cst_26 = arith.constant dense<0.000000e+00> : vector<1xf32>
    %64 = vector.multi_reduction <add>, %63, %cst_26 [1, 2] : vector<1x8x1xf32> to vector<1xf32>
    %65 = vector.shape_cast %64 : vector<1xf32> to vector<1x1x1xf32>
    %66 = vector.extract %65[0, 0, 0] : f32 from vector<1x1x1xf32>
    %cst_27 = arith.constant 8.000000e+00 : f32
    %67 = arith.divf %66, %cst_27 : f32
    %cst_28 = arith.constant 0.000000e+00 : f32
    %68 = vector.broadcast %cst_28 : f32 to vector<8x8xf32>
    %69 = arith.subf %68, %22 : vector<8x8xf32>
    %cst_29 = arith.constant 1.000000e+00 : f32
    %70 = vector.broadcast %cst_29 : f32 to vector<8x8xf32>
    %71 = arith.subf %69, %70 : vector<8x8xf32>
    %72 = math.exp %22 : vector<8x8xf32>
    %73 = arith.addf %71, %72 : vector<8x8xf32>
    %74 = arith.mulf %23, %23 : vector<8x8xf32>
    %75 = arith.addf %73, %74 : vector<8x8xf32>
    %cst_30 = arith.constant dense<0.000000e+00> : vector<8xf32>
    %76 = vector.multi_reduction <add>, %75, %cst_30 [1] : vector<8x8xf32> to vector<8xf32>
    %77 = vector.shape_cast %76 : vector<8xf32> to vector<8x1xf32>
    %cst_31 = arith.constant 5.000000e-01 : f32
    %78 = vector.broadcast %cst_31 : f32 to vector<8x1xf32>
    %79 = arith.mulf %78, %77 : vector<8x1xf32>
    %c8 = arith.constant 8 : index
    %c80_32 = arith.constant 80 : index
    %80 = vector.load %arg2[%c8, %c80_32] : memref<56x128xf32, #tpu.memory_space<vmem>>, vector<8x16xf32>
    %cst_33 = arith.constant dense<0.000000e+00> : vector<8x16xf32>
    %81 = tpu.matmul %47, %80, %cst_33 {dimension_numbers = #tpu.dot_dimension_numbers<[1], [0], [0], [1], [0, 0, 1, 1], [], []>} : vector<8x8xf32>, vector<8x16xf32>, vector<8x16xf32> -> vector<8x16xf32>
    %cst_34 = arith.constant 5.000000e-01 : f32
    %82 = vector.broadcast %cst_34 : f32 to vector<8x1xf32>
    %83 = arith.cmpf olt, %3, %82 : vector<8x1xf32>
    %84 = vector.extract_strided_slice %81 {offsets = [0, 0], sizes = [8, 8], strides = [1, 1]} : vector<8x16xf32> to vector<8x8xf32>
    %85 = vector.extract_strided_slice %81 {offsets = [0, 8], sizes = [8, 8], strides = [1, 1]} : vector<8x16xf32> to vector<8x8xf32>
    %86 = vector.shape_cast %83 : vector<8x1xi1> to vector<8x1xi1>
    %87 = vector.broadcast %86 : vector<8x1xi1> to vector<8x8xi1>
    %88 = arith.select %87, %84, %85 : vector<8x8xi1>, vector<8x8xf32>
    %89 = arith.mulf %88, %34 : vector<8x8xf32>
    %cst_35 = arith.constant dense<0.000000e+00> : vector<8xf32>
    %90 = vector.multi_reduction <add>, %89, %cst_35 [1] : vector<8x8xf32> to vector<8xf32>
    %91 = vector.shape_cast %90 : vector<8xf32> to vector<8x1xf32>
    %cst_36 = arith.constant 0.000000e+00 : f32
    %92 = vector.broadcast %cst_36 : f32 to vector<8x1xf32>
    %93 = arith.maximumf %91, %92 : vector<8x1xf32>
    %94 = math.absf %91 : vector<8x1xf32>
    %cst_37 = arith.constant 0.000000e+00 : f32
    %95 = vector.broadcast %cst_37 : f32 to vector<8x1xf32>
    %96 = arith.subf %95, %94 : vector<8x1xf32>
    %97 = math.exp %96 : vector<8x1xf32>
    %98 = math.log1p %97 : vector<8x1xf32>
    %99 = arith.addf %93, %98 : vector<8x1xf32>
    %cst_38 = arith.constant dense<0.000000e+00> : vector<8x8xf32>
    %100 = tpu.matmul %88, %34, %cst_38 {dimension_numbers = #tpu.dot_dimension_numbers<[1], [1], [0], [0], [0, 0, 1, 0], [], []>} : vector<8x8xf32>, vector<8x8xf32>, vector<8x8xf32> -> vector<8x8xf32>
    %101 = vector.broadcast %3 : vector<8x1xf32> to vector<8x8xf32>
    %102 = vector.broadcast %4 : vector<1x8xf32> to vector<8x8xf32>
    %103 = arith.subf %101, %102 : vector<8x8xf32>
    %104 = math.absf %103 : vector<8x8xf32>
    %cst_39 = arith.constant 5.000000e-01 : f32
    %105 = vector.broadcast %cst_39 : f32 to vector<8x8xf32>
    %106 = arith.cmpf olt, %104, %105 : vector<8x8xf32>
    %107 = arith.extui %106 : vector<8x8xi1> to vector<8x8xi32>
    %108 = arith.sitofp %107 : vector<8x8xi32> to vector<8x8xf32>
    %cst_40 = arith.constant 0.000000e+00 : f32
    %109 = vector.broadcast %cst_40 : f32 to vector<8x8xf32>
    %110 = arith.maximumf %100, %109 : vector<8x8xf32>
    %111 = math.absf %100 : vector<8x8xf32>
    %cst_41 = arith.constant 0.000000e+00 : f32
    %112 = vector.broadcast %cst_41 : f32 to vector<8x8xf32>
    %113 = arith.subf %112, %111 : vector<8x8xf32>
    %114 = math.exp %113 : vector<8x8xf32>
    %115 = math.log1p %114 : vector<8x8xf32>
    %116 = arith.addf %110, %115 : vector<8x8xf32>
    %117 = arith.mulf %108, %116 : vector<8x8xf32>
    %cst_42 = arith.constant dense<0.000000e+00> : vector<8xf32>
    %118 = vector.multi_reduction <add>, %117, %cst_42 [1] : vector<8x8xf32> to vector<8xf32>
    %119 = vector.shape_cast %118 : vector<8xf32> to vector<8x1xf32>
    %cst_43 = arith.constant 1.000000e-16 : f32
    %120 = vector.broadcast %cst_43 : f32 to vector<8x1xf32>
    %121 = arith.addf %99, %120 : vector<8x1xf32>
    %122 = math.log %121 : vector<8x1xf32>
    %cst_44 = arith.constant 1.000000e-16 : f32
    %123 = vector.broadcast %cst_44 : f32 to vector<8x1xf32>
    %124 = arith.addf %119, %123 : vector<8x1xf32>
    %125 = math.log %124 : vector<8x1xf32>
    %126 = arith.subf %122, %125 : vector<8x1xf32>
    %cst_45 = arith.constant 0.00999999977 : f32
    %127 = vector.broadcast %cst_45 : f32 to vector<8x1xf32>
    %128 = arith.mulf %127, %79 : vector<8x1xf32>
    %cst_46 = arith.constant 2.000000e+00 : f32
    %129 = vector.broadcast %cst_46 : f32 to vector<8x1xf32>
    %130 = arith.mulf %129, %126 : vector<8x1xf32>
    %131 = arith.subf %128, %130 : vector<8x1xf32>
    %132 = vector.shape_cast %131 : vector<8x1xf32> to vector<1x8x1xf32>
    %cst_47 = arith.constant dense<0.000000e+00> : vector<1xf32>
    %133 = vector.multi_reduction <add>, %132, %cst_47 [1, 2] : vector<1x8x1xf32> to vector<1xf32>
    %134 = vector.shape_cast %133 : vector<1xf32> to vector<1x1x1xf32>
    %135 = vector.extract %134[0, 0, 0] : f32 from vector<1x1x1xf32>
    %cst_48 = arith.constant 8.000000e+00 : f32
    %136 = arith.divf %135, %cst_48 : f32
    %137 = arith.addf %67, %136 : f32
    %138 = tpu.iota {dimensions = array<i32: 1>} : vector<8x128xi32>
    %c0_i32 = arith.constant 0 : i32
    %139 = vector.broadcast %c0_i32 : i32 to vector<8x128xi32>
    %140 = arith.cmpi eq, %138, %139 : vector<8x128xi32>
    %c1_i32 = arith.constant 1 : i32
    %141 = vector.broadcast %c1_i32 : i32 to vector<8x128xi32>
    %142 = arith.cmpi eq, %138, %141 : vector<8x128xi32>
    %c2_i32 = arith.constant 2 : i32
    %143 = vector.broadcast %c2_i32 : i32 to vector<8x128xi32>
    %144 = arith.cmpi eq, %138, %143 : vector<8x128xi32>
    %cst_49 = arith.constant 0.000000e+00 : f32
    %145 = vector.broadcast %137 : f32 to vector<8x128xf32>
    %146 = vector.broadcast %cst_49 : f32 to vector<8x128xf32>
    %147 = arith.select %144, %145, %146 : vector<8x128xi1>, vector<8x128xf32>
    %148 = vector.shape_cast %46 : vector<8x1xf32> to vector<8x1xf32>
    %149 = vector.broadcast %148 : vector<8x1xf32> to vector<8x128xf32>
    %150 = arith.select %142, %149, %147 : vector<8x128xi1>, vector<8x128xf32>
    %151 = vector.shape_cast %131 : vector<8x1xf32> to vector<8x1xf32>
    %152 = vector.broadcast %151 : vector<8x1xf32> to vector<8x128xf32>
    %153 = arith.select %140, %152, %150 : vector<8x128xi1>, vector<8x128xf32>
    %c0_50 = arith.constant 0 : index
    %c0_51 = arith.constant 0 : index
    %154 = vector.load %arg3[%c0_50, %c0_51] : memref<8x128xf32, #tpu.memory_space<vmem>>, vector<8x128xf32>
    tpu.vector_store %arg3[%c0_50, %c0_51], %153 {strides = array<i32>} : memref<8x128xf32, #tpu.memory_space<vmem>>, vector<8x128xf32>,
    return
  }
  func.func @transform_0(%arg0: i32) -> (i32, i32) {
    %c0_i32 = arith.constant 0 : i32
    %c0_i32_0 = arith.constant 0 : i32
    return %arg0, %c0_i32 : i32, i32
  }
  func.func @transform_1(%arg0: i32) -> (i32, i32) {
    %c0_i32 = arith.constant 0 : i32
    %c0_i32_0 = arith.constant 0 : i32
    %c0_i32_1 = arith.constant 0 : i32
    return %c0_i32, %c0_i32_0 : i32, i32
  }
  func.func @transform_2(%arg0: i32) -> (i32, i32) {
    %c0_i32 = arith.constant 0 : i32
    %c0_i32_0 = arith.constant 0 : i32
    return %arg0, %c0_i32 : i32, i32
  }
}

</mosaic_0001>

<llo_original>
// kernel: cvae_forward.1
$region0: #{cvae_forward.1}
  #allocation0 [shape = 'u32[]', space=smem, size = 0x4, offset = 0x4, fixed_abs, tag = 'smem constant byte address 0x4 - core index']
  #allocation1 [shape = 'u32[144,128]{1,0:T(1,128)}', space=vmem, size = 0x12000, scoped, tag = 'internal scratch']
  %s0 = inlined_call_operand.vmem [shape: f32[32,128], index: 0, kind: input, shape index: {}]
  %s1 = inlined_call_operand.vmem [shape: f32[56,128], index: 1, kind: input, shape index: {}]
  %s2 = inlined_call_operand.vmem [shape: f32[32,128], index: 2, kind: output, shape index: {}]
  %s3 = sld [smem:[#allocation0]]
  $region41: #{cvae_forward.1} parent=0
    _
  %s5 = ssub.s32 1, %s3
  %s6 = scalar_select 0, %s5, %s3
  loop: start=0, step=1, limit=6
  $region2: #{cvae_forward.1} parent=0 // loop_pre_header
    _
  $region3: #{cvae_forward.1} parent=0 // loop_header
    %s8 = sphi 0, %s12
    %p9 = scmp.ge.s32.totalorder %s8, 6
    %s18 = sphi 0, %s20
    %s21 = sphi 0, %s18
    %s22 = sphi 0, %s21
    %s38 = sphi 0, %s22
    %s42 = sphi 0, %s42
    %s44 = sphi 0, %s42
    %s45 = sphi 0, %s44
    %s59 = sphi 0, %s45
    %s65 = sphi 0, %s67
    %s68 = sphi 0, %s65
    %s69 = sphi 0, %s68
    %s85 = sphi 0, %s69
  $region4: #{cvae_forward.1} parent=0 // loop_header_branch
    %11 = sbr.rel (%p9) target = $region8
  $region5: #{cvae_forward.1} parent=0 // loop_body
    %s13 = ssub.s32 %s8, 1
    %s14 = ssub.s32 %s8, 2
    %s15 = sadd.s32 %s8, 1
    %s16 = ssub.s32 %s8, %s15
    %p17 = scmp.eq.s32.totalorder %s16, 0
    %s19 = sadd.s32 %s18, 1
    %s20 = scalar_select %p17, %s18, %s19
    %p23 = pneg %p17
    %p24 = scmp.eq.s32.totalorder %s8, 3
    %p25 = por %p23, %p24
    %p26 = scmp.ne.s32.totalorder %s18, %s21
    %p27 = scmp.eq.s32.totalorder %s8, 0
    %p28 = por %p26, %p27
    %p29 = scmp.ne.s32.totalorder %s18, %s21
    %p30 = scmp.eq.s32.totalorder %s13, 3
    %p31 = por %p29, %p30
    %p32 = scmp.ne.s32.totalorder %s21, %s22
    %p33 = scmp.eq.s32.totalorder %s13, 0
    %p34 = por %p32, %p33
    %p35 = scmp.ne.s32.totalorder %s21, %s22
    %p36 = scmp.eq.s32.totalorder %s14, 3
    %p37 = por %p35, %p36
    %p39 = scmp.ne.s32.totalorder %s22, %s38
    %p40 = scmp.eq.s32.totalorder %s14, 0
    %p41 = por %p39, %p40
    %s43 = sadd.s32 %s42, 1
    %p46 = scmp.eq.s32.totalorder %s8, 3
    %p47 = scmp.ne.s32.totalorder %s42, %s44
    %p48 = scmp.eq.s32.totalorder %s8, 0
    %p49 = por %p47, %p48
    %p50 = scmp.ne.s32.totalorder %s42, %s44
    %p51 = scmp.eq.s32.totalorder %s13, 3
    %p52 = por %p50, %p51
    %p53 = scmp.ne.s32.totalorder %s44, %s45
    %p54 = scmp.eq.s32.totalorder %s13, 0
    %p55 = por %p53, %p54
    %p56 = scmp.ne.s32.totalorder %s44, %s45
    %p57 = scmp.eq.s32.totalorder %s14, 3
    %p58 = por %p56, %p57
    %p60 = scmp.ne.s32.totalorder %s45, %s59
    %p61 = scmp.eq.s32.totalorder %s14, 0
    %p62 = por %p60, %p61
    %s63 = ssub.s32 %s8, %s15
    %p64 = scmp.eq.s32.totalorder %s63, 0
    %s66 = sadd.s32 %s65, 1
    %s67 = scalar_select %p64, %s65, %s66
    %p70 = pneg %p64
    %p71 = scmp.eq.s32.totalorder %s8, 3
    %p72 = por %p70, %p71
    %p73 = scmp.ne.s32.totalorder %s65, %s68
    %p74 = scmp.eq.s32.totalorder %s8, 0
    %p75 = por %p73, %p74
    %p76 = scmp.ne.s32.totalorder %s65, %s68
    %p77 = scmp.eq.s32.totalorder %s13, 3
    %p78 = por %p76, %p77
    %p79 = scmp.ne.s32.totalorder %s68, %s69
    %p80 = scmp.eq.s32.totalorder %s13, 0
    %p81 = por %p79, %p80
    %p82 = scmp.ne.s32.totalorder %s68, %s69
    %p83 = scmp.eq.s32.totalorder %s14, 3
    %p84 = por %p82, %p83
    %p86 = scmp.ne.s32.totalorder %s69, %s85
    %p87 = scmp.eq.s32.totalorder %s14, 0
    %p88 = por %p86, %p87
    %p89 = scmp.le.s32.totalorder 1, %s8
    %p90 = scmp.lt.s32.totalorder %s8, 5
    %p91 = pnand %p89, %p90
    %p92 = pneg %p91
    // Predicated region
    $region9: #{cvae_forward.1} parent=5 // pred_check
      _
    $region10: #{cvae_forward.1} parent=5 // pred_check_branch
      %94 = sbr.rel (%p91) target = $region12
    $region11: #{cvae_forward.1} parent=5 // pred_region
      %s95 = ssub.s32 %s8, 1
      // Predicated region
      $region13: #{cvae_forward.1} parent=11 // pred_check
        %p96 = pneg %p55
      $region14: #{cvae_forward.1} parent=11 // pred_check_branch
        %98 = sbr.rel (%p96) target = $region16
      $region15: #{cvae_forward.1} parent=11 // pred_region
        _
      $region16: #{cvae_forward.1} parent=11 // pred_fallthru
        _
    $region12: #{cvae_forward.1} parent=5 // pred_fallthru
      _
    %p99 = scmp.lt.s32.totalorder %s8, 4
    // Predicated region
    $region17: #{cvae_forward.1} parent=5 // pred_check
      %p100 = pneg %p99
    $region18: #{cvae_forward.1} parent=5 // pred_check_branch
      %102 = sbr.rel (%p100) target = $region20
    $region19: #{cvae_forward.1} parent=5 // pred_region
      // Predicated region
      $region21: #{cvae_forward.1} parent=19 // pred_check
        %p103 = pneg %p28
      $region22: #{cvae_forward.1} parent=19 // pred_check_branch
        %105 = sbr.rel (%p103) target = $region24
      $region23: #{cvae_forward.1} parent=19 // pred_region
        %p106 = scmp.lt.s32.totalorder %s8, 3
        %s107 = scalar_select %p106, %s8, 3
        %s108 = smul.addr %s107, 8
        %s109 = scalar_lea.vmem %s0, %s108
      $region24: #{cvae_forward.1} parent=19 // pred_fallthru
        _
    $region20: #{cvae_forward.1} parent=5 // pred_fallthru
      _
    %p110 = scmp.le.s32.totalorder 1, %s8
    %p111 = scmp.lt.s32.totalorder %s8, 5
    %p112 = pnand %p110, %p111
    %p113 = pneg %p112
    // Predicated region
    $region25: #{cvae_forward.1} parent=5 // pred_check
      _
    $region26: #{cvae_forward.1} parent=5 // pred_check_branch
      %115 = sbr.rel (%p112) target = $region28
    $region27: #{cvae_forward.1} parent=5 // pred_region
      %s116 = ssub.s32 %s8, 1
      %p117 = scmp.lt.s32.totalorder %s13, 3
      %s118 = scalar_select %p117, %s13, 3
      %s119 = smul.addr %s118, 8
      %s120 = scalar_lea.vmem %s0, %s119
      %p121 = pneg %p34
      %p122 = pneg %p31
      %p123 = pneg %p55
      %p124 = pneg %p52
      %p125 = pneg %p81
      %p126 = pneg %p78
      %p127 = scmp.lt.s32.totalorder %s13, 3
      %s128 = scalar_select %p127, %s13, 3
      %s129 = smul.addr %s128, 8
      %s130 = scalar_lea.vmem %s2, %s129
      %p131 = scmp.lt.s32.totalorder %s13, 3
      %s132 = scalar_select %p131, %s13, 3
      %s133 = smul.addr %s132, 8
      %s134 = scalar_lea.vmem %s0, %s133
      %p135 = scmp.lt.s32.totalorder %s13, 3
      %s136 = scalar_select %p135, %s13, 3
      %s137 = smul.addr %s136, 8
      %s138 = scalar_lea.vmem %s2, %s137
      %v139 = vld [vmem:[%s134] sm:$0xff]
      %v140 = vld [vmem:[%s134] sm:$0x1]
      %v141 = vld [vmem:[%s1] sm:$0xff]
      %v142 = vld [vmem:[%s1 + $0x8] sm:$0xff]
      %v143 = vld [vmem:[%s1 + $0x10] sm:$0x3]
      %v144 = vld [vmem:[%s1 + $0x30] sm:$0x1]
      %v145 = vlaneseq
      %v146 = vshrl.u32 %v145, 7
      %v147 = vsub.s32 0, %v146
      %v148 = vrot.slane %v144, %v147
      %152 = vrot.lane.b32.xlu0 %v141, 96
      %v153 = vpop.permute.xlu0 %152
      %154 = vrot.lane.b32.xlu0 %v142, 96
      %v155 = vpop.permute.xlu0 %154
      %156 = vrot.lane.b32.xlu0 %v143, 96
      %v157 = vpop.permute.xlu0 %156
      %vm160 = vcmask 146432
      %v162 = vsel %vm160, %v139, 0
      %vm164 = vcmask 1041408
      %v165 = vsel %vm164, %v157, 0
      %167 = vmatprep.subr.mxu0 0.0
      %168 = vmatpush1.msra.mxu0 0.0
      %169 = vmatprep.subr.mxu0 0.0
      %170 = vmatpush1.msra.mxu0 0.0
      %171 = vmatprep.subr.mxu0 0.0
      %172 = vmatpush1.msra.mxu0 0.0
      %173 = vmatprep.subr.mxu0 0.0
      %174 = vmatpush1.msra.mxu0 0.0
      %175 = vmatprep.subr.mxu0 0.0
      %176 = vmatpush1.msra.mxu0 0.0
      %177 = vmatprep.subr.mxu0 0.0
      %178 = vmatpush1.msra.mxu0 0.0
      %179 = vmatprep.subr.mxu0 0.0
      %180 = vmatpush1.msra.mxu0 0.0
      %181 = vmatprep.subr.mxu0 0.0
      %182 = vmatpush1.msra.mxu0 0.0
      %183 = vmatprep.subr.mxu0 0.0
      %184 = vmatpush1.msra.mxu0 0.0
      %185 = vmatprep.subr.mxu0 0.0
      %186 = vmatpush1.msra.mxu0 0.0
      %187 = vmatprep.subr.mxu0 0.0
      %188 = vmatpush1.msra.mxu0 0.0
      %189 = vmatprep.subr.mxu0 0.0
      %190 = vmatpush1.msra.mxu0 0.0
      %191 = vmatprep.subr.mxu0 0.0
      %192 = vmatpush1.msra.mxu0 0.0
      %193 = vmatprep.subr.mxu0 0.0
      %194 = vmatpush1.msra.mxu0 %v165
      %195 = vmatprep.subr.mxu0 0.0
      %196 = vmatpush1.msra.mxu0 %v155
      %197 = vmatprep.subr.mxu0 0.0
      %198 = vmatpush1.msra.mxu0 %v153
      %199 = vmatprep.subr.mxu0 0.0
      %200 = vmatpush2.msra.mxu0 0.0
      %201 = vmatprep.subr.mxu0 0.0
      %202 = vmatpush2.msra.mxu0 0.0
      %203 = vmatprep.subr.mxu0 0.0
      %204 = vmatpush2.msra.mxu0 0.0
      %205 = vmatprep.subr.mxu0 0.0
      %206 = vmatpush2.msra.mxu0 0.0
      %207 = vmatprep.subr.mxu0 0.0
      %208 = vmatpush2.msra.mxu0 0.0
      %209 = vmatprep.subr.mxu0 0.0
      %210 = vmatpush2.msra.mxu0 0.0
      %211 = vmatprep.subr.mxu0 0.0
      %212 = vmatpush2.msra.mxu0 0.0
      %213 = vmatprep.subr.mxu0 0.0
      %214 = vmatpush2.msra.mxu0 0.0
      %215 = vmatprep.subr.mxu0 0.0
      %216 = vmatpush2.msra.mxu0 0.0
      %217 = vmatprep.subr.mxu0 0.0
      %218 = vmatpush2.msra.mxu0 0.0
      %219 = vmatprep.subr.mxu0 0.0
      %220 = vmatpush2.msra.mxu0 0.0
      %221 = vmatprep.subr.mxu0 0.0
      %222 = vmatpush2.msra.mxu0 0.0
      %223 = vmatprep.subr.mxu0 0.0
      %224 = vmatpush2.msra.mxu0 0.0
      %225 = vmatprep.subr.mxu0 0.0
      %226 = vmatpush2.msra.mxu0 0.0
      %227 = vmatprep.subr.mxu0 0.0
      %228 = vmatpush2.msra.mxu0 0.0
      %229 = vmatprep.subr.mxu0 0.0
      %230 = vmatpush2.msra.mxu0 0.0
      %231 = vmatprep.mubr.f32.mxu0 0.0
      %232 = vmatmul.mubr.f32.gmra.mxu0 %v162
      %v233 = vpop.f32.mrf.mxu0
      %v234 = vadd.f32 %v148, %v233
      %v235 = vpop.f32.mrf.mxu0
      %236 = vdwg.mxu0
      %v237 = vmax.f32 %v234, 0.0
      %v238 = vld [vmem:[%s1] sm:$0xff]
      %v239 = vld [vmem:[%s1 + $0x8] sm:$0xff]
      %v240 = vld [vmem:[%s1 + $0x10] sm:$0xff]
      %v241 = vld [vmem:[%s1 + $0x18] sm:$0xff]
      %v242 = vld [vmem:[%s1 + $0x31] sm:$0x1]
      %v243 = vlaneseq
      %v244 = vshrl.u32 %v243, 7
      %v245 = vsub.s32 0, %v244
      %v246 = vrot.slane %v242, %v245
      %251 = vrot.lane.b32.xlu0 %v238, 112
      %v252 = vpop.permute.xlu0 %251
      %253 = vrot.lane.b32.xlu0 %v239, 112
      %v254 = vpop.permute.xlu0 %253
      %255 = vrot.lane.b32.xlu0 %v240, 112
      %v256 = vpop.permute.xlu0 %255
      %257 = vrot.lane.b32.xlu0 %v241, 112
      %v258 = vpop.permute.xlu0 %257
      %vm263 = vcmask 261120
      %v265 = vsel %vm263, %v234, 0
      %267 = vmatprep.subr.mxu0 0.0
      %268 = vmatpush1.msra.mxu0 0.0
      %269 = vmatprep.subr.mxu0 0.0
      %270 = vmatpush1.msra.mxu0 0.0
      %271 = vmatprep.subr.mxu0 0.0
      %272 = vmatpush1.msra.mxu0 0.0
      %273 = vmatprep.subr.mxu0 0.0
      %274 = vmatpush1.msra.mxu0 0.0
      %275 = vmatprep.subr.mxu0 0.0
      %276 = vmatpush1.msra.mxu0 0.0
      %277 = vmatprep.subr.mxu0 0.0
      %278 = vmatpush1.msra.mxu0 0.0
      %279 = vmatprep.subr.mxu0 0.0
      %280 = vmatpush1.msra.mxu0 0.0
      %281 = vmatprep.subr.mxu0 0.0
      %282 = vmatpush1.msra.mxu0 0.0
      %283 = vmatprep.subr.mxu0 0.0
      %284 = vmatpush1.msra.mxu0 0.0
      %285 = vmatprep.subr.mxu0 0.0
      %286 = vmatpush1.msra.mxu0 0.0
      %287 = vmatprep.subr.mxu0 0.0
      %288 = vmatpush1.msra.mxu0 0.0
      %289 = vmatprep.subr.mxu0 0.0
      %290 = vmatpush1.msra.mxu0 0.0
      %291 = vmatprep.subr.mxu0 0.0
      %292 = vmatpush1.msra.mxu0 %v258
      %293 = vmatprep.subr.mxu0 0.0
      %294 = vmatpush1.msra.mxu0 %v256
      %295 = vmatprep.subr.mxu0 0.0
      %296 = vmatpush1.msra.mxu0 %v254
      %297 = vmatprep.subr.mxu0 0.0
      %298 = vmatpush1.msra.mxu0 %v252
      %299 = vmatprep.subr.mxu0 0.0
      %300 = vmatpush2.msra.mxu0 0.0
      %301 = vmatprep.subr.mxu0 0.0
      %302 = vmatpush2.msra.mxu0 0.0
      %303 = vmatprep.subr.mxu0 0.0
      %304 = vmatpush2.msra.mxu0 0.0
      %305 = vmatprep.subr.mxu0 0.0
      %306 = vmatpush2.msra.mxu0 0.0
      %307 = vmatprep.subr.mxu0 0.0
      %308 = vmatpush2.msra.mxu0 0.0
      %309 = vmatprep.subr.mxu0 0.0
      %310 = vmatpush2.msra.mxu0 0.0
      %311 = vmatprep.subr.mxu0 0.0
      %312 = vmatpush2.msra.mxu0 0.0
      %313 = vmatprep.subr.mxu0 0.0
      %314 = vmatpush2.msra.mxu0 0.0
      %315 = vmatprep.subr.mxu0 0.0
      %316 = vmatpush2.msra.mxu0 0.0
      %317 = vmatprep.subr.mxu0 0.0
      %318 = vmatpush2.msra.mxu0 0.0
      %319 = vmatprep.subr.mxu0 0.0
      %320 = vmatpush2.msra.mxu0 0.0
      %321 = vmatprep.subr.mxu0 0.0
      %322 = vmatpush2.msra.mxu0 0.0
      %323 = vmatprep.subr.mxu0 0.0
      %324 = vmatpush2.msra.mxu0 0.0
      %325 = vmatprep.subr.mxu0 0.0
      %326 = vmatpush2.msra.mxu0 0.0
      %327 = vmatprep.subr.mxu0 0.0
      %328 = vmatpush2.msra.mxu0 0.0
      %329 = vmatprep.subr.mxu0 0.0
      %330 = vmatpush2.msra.mxu0 0.0
      %331 = vmatprep.mubr.f32.mxu0 0.0
      %332 = vmatmul.mubr.f32.gmra.mxu0 %v265
      %v333 = vpop.f32.mrf.mxu0
      %v334 = vadd.f32 %v246, %v333
      %v335 = vpop.f32.mrf.mxu0
      %336 = vdwg.mxu0
      %v337 = vmul.f32 %v334, 0.5
      %v338 = vmul.f32 %v337, 1.442695
      %v339 = vpow.pop %v338
      %341 = vrot.lane.b32.xlu0 %v334, 11
      %v342 = vpop.permute.xlu0 %341
      %v344 = vmul.f32 %v139, %v342
      %346 = vrot.lane.b32.xlu0 %v339, 19
      %v347 = vpop.permute.xlu0 %346
      %v349 = vadd.f32 %v344, %v347
      %v350 = vld [vmem:[%s1] sm:$0xff]
      %v351 = vld [vmem:[%s1 + $0x32] sm:$0x1]
      %v352 = vlaneseq
      %v353 = vshrl.u32 %v352, 7
      %v354 = vsub.s32 0, %v353
      %v355 = vrot.slane %v351, %v354
      %357 = vrot.lane.b32.xlu0 %v349, 109
      %v358 = vpop.permute.xlu0 %357
      %360 = vrot.lane.b32.xlu0 %v350, 48
      %v361 = vpop.permute.xlu0 %360
      %vm363 = vcmask 64512
      %v364 = vsel %vm363, %v358, 0
      %366 = vmatprep.subr.mxu0 0.0
      %367 = vmatpush1.msra.mxu0 0.0
      %368 = vmatprep.subr.mxu0 0.0
      %369 = vmatpush1.msra.mxu0 0.0
      %370 = vmatprep.subr.mxu0 0.0
      %371 = vmatpush1.msra.mxu0 0.0
      %372 = vmatprep.subr.mxu0 0.0
      %373 = vmatpush1.msra.mxu0 0.0
      %374 = vmatprep.subr.mxu0 0.0
      %375 = vmatpush1.msra.mxu0 0.0
      %376 = vmatprep.subr.mxu0 0.0
      %377 = vmatpush1.msra.mxu0 0.0
      %378 = vmatprep.subr.mxu0 0.0
      %379 = vmatpush1.msra.mxu0 0.0
      %380 = vmatprep.subr.mxu0 0.0
      %381 = vmatpush1.msra.mxu0 0.0
      %382 = vmatprep.subr.mxu0 0.0
      %383 = vmatpush1.msra.mxu0 0.0
      %384 = vmatprep.subr.mxu0 0.0
      %385 = vmatpush1.msra.mxu0 0.0
      %386 = vmatprep.subr.mxu0 0.0
      %387 = vmatpush1.msra.mxu0 0.0
      %388 = vmatprep.subr.mxu0 0.0
      %389 = vmatpush1.msra.mxu0 0.0
      %390 = vmatprep.subr.mxu0 0.0
      %391 = vmatpush1.msra.mxu0 0.0
      %392 = vmatprep.subr.mxu0 0.0
      %393 = vmatpush1.msra.mxu0 0.0
      %394 = vmatprep.subr.mxu0 0.0
      %395 = vmatpush1.msra.mxu0 0.0
      %396 = vmatprep.subr.mxu0 0.0
      %397 = vmatpush1.msra.mxu0 %v361
      %398 = vmatprep.subr.mxu0 0.0
      %399 = vmatpush2.msra.mxu0 0.0
      %400 = vmatprep.subr.mxu0 0.0
      %401 = vmatpush2.msra.mxu0 0.0
      %402 = vmatprep.subr.mxu0 0.0
      %403 = vmatpush2.msra.mxu0 0.0
      %404 = vmatprep.subr.mxu0 0.0
      %405 = vmatpush2.msra.mxu0 0.0
      %406 = vmatprep.subr.mxu0 0.0
      %407 = vmatpush2.msra.mxu0 0.0
      %408 = vmatprep.subr.mxu0 0.0
      %409 = vmatpush2.msra.mxu0 0.0
      %410 = vmatprep.subr.mxu0 0.0
      %411 = vmatpush2.msra.mxu0 0.0
      %412 = vmatprep.subr.mxu0 0.0
      %413 = vmatpush2.msra.mxu0 0.0
      %414 = vmatprep.subr.mxu0 0.0
      %415 = vmatpush2.msra.mxu0 0.0
      %416 = vmatprep.subr.mxu0 0.0
      %417 = vmatpush2.msra.mxu0 0.0
      %418 = vmatprep.subr.mxu0 0.0
      %419 = vmatpush2.msra.mxu0 0.0
      %420 = vmatprep.subr.mxu0 0.0
      %421 = vmatpush2.msra.mxu0 0.0
      %422 = vmatprep.subr.mxu0 0.0
      %423 = vmatpush2.msra.mxu0 0.0
      %424 = vmatprep.subr.mxu0 0.0
      %425 = vmatpush2.msra.mxu0 0.0
      %426 = vmatprep.subr.mxu0 0.0
      %427 = vmatpush2.msra.mxu0 0.0
      %428 = vmatprep.subr.mxu0 0.0
      %429 = vmatpush2.msra.mxu0 0.0
      %430 = vmatprep.mubr.f32.mxu0 0.0
      %431 = vmatmul.mubr.f32.gmra.mxu0 %v364
      %v432 = vpop.f32.mrf.mxu0
      %v433 = vadd.f32 %v355, %v432
      %v434 = vpop.f32.mrf.mxu0
      %435 = vdwg.mxu0
      %v436 = vmax.f32 %v433, 0.0
      %v437 = vsel %vm263, %v436, %v237
      %v438 = vld [vmem:[%s1] sm:$0xff]
      %v439 = vld [vmem:[%s1 + $0x8] sm:$0xff]
      %v440 = vld [vmem:[%s1 + $0x10] sm:$0xff]
      %v441 = vld [vmem:[%s1 + $0x18] sm:$0xff]
      %v442 = vld [vmem:[%s1 + $0x20] sm:$0xff]
      %v443 = vld [vmem:[%s1 + $0x28] sm:$0xff]
      %v444 = vld [vmem:[%s1 + $0x33] sm:$0x1]
      %v445 = vlaneseq
      %v446 = vshrl.u32 %v445, 7
      %v447 = vsub.s32 0, %v446
      %v448 = vrot.slane %v444, %v447
      %vm449 = vcmask 392192
      %v451 = vsel %vm449, %v437, 0
      %453 = vmatprep.subr.mxu0 0.0
      %454 = vmatpush1.msra.mxu0 0.0
      %455 = vmatprep.subr.mxu0 0.0
      %456 = vmatpush1.msra.mxu0 0.0
      %457 = vmatprep.subr.mxu0 0.0
      %458 = vmatpush1.msra.mxu0 0.0
      %459 = vmatprep.subr.mxu0 0.0
      %460 = vmatpush1.msra.mxu0 0.0
      %461 = vmatprep.subr.mxu0 0.0
      %462 = vmatpush1.msra.mxu0 0.0
      %463 = vmatprep.subr.mxu0 0.0
      %464 = vmatpush1.msra.mxu0 0.0
      %465 = vmatprep.subr.mxu0 0.0
      %466 = vmatpush1.msra.mxu0 0.0
      %467 = vmatprep.subr.mxu0 0.0
      %468 = vmatpush1.msra.mxu0 0.0
      %469 = vmatprep.subr.mxu0 0.0
      %470 = vmatpush1.msra.mxu0 0.0
      %471 = vmatprep.subr.mxu0 0.0
      %472 = vmatpush1.msra.mxu0 0.0
      %473 = vmatprep.subr.mxu0 0.0
      %474 = vmatpush1.msra.mxu0 %v443
      %475 = vmatprep.subr.mxu0 0.0
      %476 = vmatpush1.msra.mxu0 %v442
      %477 = vmatprep.subr.mxu0 0.0
      %478 = vmatpush1.msra.mxu0 %v441
      %479 = vmatprep.subr.mxu0 0.0
      %480 = vmatpush1.msra.mxu0 %v440
      %481 = vmatprep.subr.mxu0 0.0
      %482 = vmatpush1.msra.mxu0 %v439
      %483 = vmatprep.subr.mxu0 0.0
      %484 = vmatpush1.msra.mxu0 %v438
      %485 = vmatprep.subr.mxu0 0.0
      %486 = vmatpush2.msra.mxu0 0.0
      %487 = vmatprep.subr.mxu0 0.0
      %488 = vmatpush2.msra.mxu0 0.0
      %489 = vmatprep.subr.mxu0 0.0
      %490 = vmatpush2.msra.mxu0 0.0
      %491 = vmatprep.subr.mxu0 0.0
      %492 = vmatpush2.msra.mxu0 0.0
      %493 = vmatprep.subr.mxu0 0.0
      %494 = vmatpush2.msra.mxu0 0.0
      %495 = vmatprep.subr.mxu0 0.0
      %496 = vmatpush2.msra.mxu0 0.0
      %497 = vmatprep.subr.mxu0 0.0
      %498 = vmatpush2.msra.mxu0 0.0
      %499 = vmatprep.subr.mxu0 0.0
      %500 = vmatpush2.msra.mxu0 0.0
      %501 = vmatprep.subr.mxu0 0.0
      %502 = vmatpush2.msra.mxu0 0.0
      %503 = vmatprep.subr.mxu0 0.0
      %504 = vmatpush2.msra.mxu0 0.0
      %505 = vmatprep.subr.mxu0 0.0
      %506 = vmatpush2.msra.mxu0 0.0
      %507 = vmatprep.subr.mxu0 0.0
      %508 = vmatpush2.msra.mxu0 0.0
      %509 = vmatprep.subr.mxu0 0.0
      %510 = vmatpush2.msra.mxu0 0.0
      %511 = vmatprep.subr.mxu0 0.0
      %512 = vmatpush2.msra.mxu0 0.0
      %513 = vmatprep.subr.mxu0 0.0
      %514 = vmatpush2.msra.mxu0 0.0
      %515 = vmatprep.subr.mxu0 0.0
      %516 = vmatpush2.msra.mxu0 0.0
      %517 = vmatprep.mubr.f32.mxu0 0.0
      %518 = vmatmul.mubr.f32.gmra.mxu0 %v451
      %v519 = vpop.f32.mrf.mxu0
      %v520 = vadd.f32 %v448, %v519
      %v521 = vpop.f32.mrf.mxu0
      %522 = vdwg.mxu0
      %v523 = vxor.u32 %v520, 2147483648
      %v524 = vmul.f32 %v523, 1.442695
      %v525 = vpow.pop %v524
      %v526 = vadd.f32 %v525, 1.0
      %v527 = vrcp.pop %v526
      %v528 = vmul.f32 1.0, %v527
      %v529 = vlog2.pop %v528
      %v530 = vmul.f32 %v529, 0.6931472
      %v531 = vmax.f32 %v530, -100.0
      %v532 = vsub.f32 1.0, %v528
      %v533 = vlog2.pop %v532
      %v534 = vmul.f32 %v533, 0.6931472
      %v535 = vmax.f32 %v534, -100.0
      %537 = vrot.lane.b32.xlu0 %v531, 18
      %v538 = vpop.permute.xlu0 %537
      %v540 = vmul.f32 %v139, %v538
      %v541 = vsub.f32 1.0, %v139
      %543 = vrot.lane.b32.xlu0 %v535, 18
      %v544 = vpop.permute.xlu0 %543
      %v546 = vmul.f32 %v541, %v544
      %v547 = vadd.f32 %v540, %v546
      %v548 = vsub.f32 0.0, %v547
      %550 = vrot.lane.b32.xlu0 %v548, 110
      %v551 = vpop.permute.xlu0 %550
      %vm553 = vcmask 7168
      %v554 = vsel %vm553, %v551, 0.0
      %555 = vadd.xlane.f32.xlu0 %v554
      %v556 = vpop.xlane.xlu0 %555
      %v557 = vrot.slane %v556, 4
      %v558 = vadd.f32 %v556, %v557
      %v559 = vrot.slane %v558, 2
      %v560 = vadd.f32 %v558, %v559
      %v561 = vrot.slane %v560, 1
      %v562 = vadd.f32 %v560, %v561
      %s563 = vtos %v562
      %v564 = vrcp.pop 8.0
      %s565 = vtos %v564
      %s566 = smul.f32 %s563, %s565
      %v567 = vsub.f32 0.0, %v339
      %v568 = vsub.f32 %v567, 1.0
      %v569 = vmul.f32 %v339, 1.442695
      %v570 = vpow.pop %v569
      %v571 = vadd.f32 %v568, %v570
      %v572 = vmul.f32 %v334, %v334
      %574 = vrot.lane.b32.xlu0 %v572, 120
      %v575 = vpop.permute.xlu0 %574
      %v577 = vadd.f32 %v571, %v575
      %v578 = vsel %vm363, %v577, 0.0
      %579 = vadd.xlane.f32.xlu0 %v578
      %v580 = vpop.xlane.xlu0 %579
      %v581 = vmul.f32 %v580, 0.5
      %v582 = vld [vmem:[%s1 + $0x8] sm:$0xff]
      %584 = vrot.lane.b32.xlu0 %v520, 127
      %v585 = vpop.permute.xlu0 %584
      %587 = vrot.lane.b32.xlu0 %v582, 48
      %v588 = vpop.permute.xlu0 %587
      %v590 = vsel %vm363, %v585, 0
      %592 = vmatprep.subr.mxu0 0.0
      %593 = vmatpush1.msra.mxu0 0.0
      %594 = vmatprep.subr.mxu0 0.0
      %595 = vmatpush1.msra.mxu0 0.0
      %596 = vmatprep.subr.mxu0 0.0
      %597 = vmatpush1.msra.mxu0 0.0
      %598 = vmatprep.subr.mxu0 0.0
      %599 = vmatpush1.msra.mxu0 0.0
      %600 = vmatprep.subr.mxu0 0.0
      %601 = vmatpush1.msra.mxu0 0.0
      %602 = vmatprep.subr.mxu0 0.0
      %603 = vmatpush1.msra.mxu0 0.0
      %604 = vmatprep.subr.mxu0 0.0
      %605 = vmatpush1.msra.mxu0 0.0
      %606 = vmatprep.subr.mxu0 0.0
      %607 = vmatpush1.msra.mxu0 0.0
      %608 = vmatprep.subr.mxu0 0.0
      %609 = vmatpush1.msra.mxu0 0.0
      %610 = vmatprep.subr.mxu0 0.0
      %611 = vmatpush1.msra.mxu0 0.0
      %612 = vmatprep.subr.mxu0 0.0
      %613 = vmatpush1.msra.mxu0 0.0
      %614 = vmatprep.subr.mxu0 0.0
      %615 = vmatpush1.msra.mxu0 0.0
      %616 = vmatprep.subr.mxu0 0.0
      %617 = vmatpush1.msra.mxu0 0.0
      %618 = vmatprep.subr.mxu0 0.0
      %619 = vmatpush1.msra.mxu0 0.0
      %620 = vmatprep.subr.mxu0 0.0
      %621 = vmatpush1.msra.mxu0 0.0
      %622 = vmatprep.subr.mxu0 0.0
      %623 = vmatpush1.msra.mxu0 %v588
      %624 = vmatprep.subr.mxu0 0.0
      %625 = vmatpush2.msra.mxu0 0.0
      %626 = vmatprep.subr.mxu0 0.0
      %627 = vmatpush2.msra.mxu0 0.0
      %628 = vmatprep.subr.mxu0 0.0
      %629 = vmatpush2.msra.mxu0 0.0
      %630 = vmatprep.subr.mxu0 0.0
      %631 = vmatpush2.msra.mxu0 0.0
      %632 = vmatprep.subr.mxu0 0.0
      %633 = vmatpush2.msra.mxu0 0.0
      %634 = vmatprep.subr.mxu0 0.0
      %635 = vmatpush2.msra.mxu0 0.0
      %636 = vmatprep.subr.mxu0 0.0
      %637 = vmatpush2.msra.mxu0 0.0
      %638 = vmatprep.subr.mxu0 0.0
      %639 = vmatpush2.msra.mxu0 0.0
      %640 = vmatprep.subr.mxu0 0.0
      %641 = vmatpush2.msra.mxu0 0.0
      %642 = vmatprep.subr.mxu0 0.0
      %643 = vmatpush2.msra.mxu0 0.0
      %644 = vmatprep.subr.mxu0 0.0
      %645 = vmatpush2.msra.mxu0 0.0
      %646 = vmatprep.subr.mxu0 0.0
      %647 = vmatpush2.msra.mxu0 0.0
      %648 = vmatprep.subr.mxu0 0.0
      %649 = vmatpush2.msra.mxu0 0.0
      %650 = vmatprep.subr.mxu0 0.0
      %651 = vmatpush2.msra.mxu0 0.0
      %652 = vmatprep.subr.mxu0 0.0
      %653 = vmatpush2.msra.mxu0 0.0
      %654 = vmatprep.subr.mxu0 0.0
      %655 = vmatpush2.msra.mxu0 0.0
      %656 = vmatprep.mubr.f32.mxu0 0.0
      %657 = vmatmul.mubr.f32.gmra.mxu0 %v590
      %v658 = vpop.f32.mrf.mxu0
      %v659 = vadd.f32 0.0, %v658
      %v660 = vpop.f32.mrf.mxu0
      %661 = vdwg.mxu0
      %vm662 = vcmp.lt.f32.partialorder %v139, 0.5
      %v663 = vsel %vm662, 1, 0
      %664 = vset.pattern.permute.xlu0 27
      %665 = vperm.xlu0 %664, %v663
      %v666 = vpop.permute.xlu0 %665
      %vm667 = vcmp.eq.s32.totalorder %v666, 1
      %669 = vrot.lane.b32.xlu0 %v659, 120
      %v670 = vpop.permute.xlu0 %669
      %v672 = vsel %vm667, %v659, %v670
      %674 = vrot.lane.b32.xlu0 %v433, 96
      %v675 = vpop.permute.xlu0 %674
      %v677 = vmul.f32 %v672, %v675
      %v678 = vsel %vm363, %v677, 0.0
      %679 = vadd.xlane.f32.xlu0 %v678
      %v680 = vpop.xlane.xlu0 %679
      %v681 = vmax.f32 %v680, 0.0
      %v682 = vand.u32 2147483647, %v680
      %v683 = vsub.f32 0.0, %v682
      %v684 = vmul.f32 %v683, 1.442695
      %v685 = vpow.pop %v684
      %v686 = vadd.f32 %v685, 1.0
      %v687 = vlog2.pop %v686
      %v688 = vmul.f32 %v687, 0.6931472
      %v689 = vmul.f32 -0.5, %v685
      %v690 = vadd.f32 %v689, 1.0
      %v691 = vmul.f32 %v690, %v685
      %v692 = vand.u32 2147483647, %v685
      %vm693 = vcmp.lt.f32.partialorder %v692, 0.0004427343
      %v694 = vsel %vm693, %v691, %v688
      %v695 = vadd.f32 %v681, %v694
      %v697 = vsel %vm363, %v672, 0
      %v699 = vsel %vm363, %v675, 0
      %701 = vmatprep.subr.mxu0 0.0
      %702 = vmatpush1.xpose.msra.mxu0 0.0
      %703 = vmatprep.subr.mxu0 0.0
      %704 = vmatpush1.xpose.msra.mxu0 0.0
      %705 = vmatprep.subr.mxu0 0.0
      %706 = vmatpush1.xpose.msra.mxu0 0.0
      %707 = vmatprep.subr.mxu0 0.0
      %708 = vmatpush1.xpose.msra.mxu0 0.0
      %709 = vmatprep.subr.mxu0 0.0
      %710 = vmatpush1.xpose.msra.mxu0 0.0
      %711 = vmatprep.subr.mxu0 0.0
      %712 = vmatpush1.xpose.msra.mxu0 0.0
      %713 = vmatprep.subr.mxu0 0.0
      %714 = vmatpush1.xpose.msra.mxu0 0.0
      %715 = vmatprep.subr.mxu0 0.0
      %716 = vmatpush1.xpose.msra.mxu0 0.0
      %717 = vmatprep.subr.mxu0 0.0
      %718 = vmatpush1.xpose.msra.mxu0 0.0
      %719 = vmatprep.subr.mxu0 0.0
      %720 = vmatpush1.xpose.msra.mxu0 0.0
      %721 = vmatprep.subr.mxu0 0.0
      %722 = vmatpush1.xpose.msra.mxu0 0.0
      %723 = vmatprep.subr.mxu0 0.0
      %724 = vmatpush1.xpose.msra.mxu0 0.0
      %725 = vmatprep.subr.mxu0 0.0
      %726 = vmatpush1.xpose.msra.mxu0 0.0
      %727 = vmatprep.subr.mxu0 0.0
      %728 = vmatpush1.xpose.msra.mxu0 0.0
      %729 = vmatprep.subr.mxu0 0.0
      %730 = vmatpush1.xpose.msra.mxu0 0.0
      %731 = vmatprep.subr.mxu0 0.0
      %732 = vmatpush1.xpose.msra.mxu0 %v699
      %733 = vmatprep.subr.mxu0 0.0
      %734 = vmatpush2.xpose.msra.mxu0 0.0
      %735 = vmatprep.subr.mxu0 0.0
      %736 = vmatpush2.xpose.msra.mxu0 0.0
      %737 = vmatprep.subr.mxu0 0.0
      %738 = vmatpush2.xpose.msra.mxu0 0.0
      %739 = vmatprep.subr.mxu0 0.0
      %740 = vmatpush2.xpose.msra.mxu0 0.0
      %741 = vmatprep.subr.mxu0 0.0
      %742 = vmatpush2.xpose.msra.mxu0 0.0
      %743 = vmatprep.subr.mxu0 0.0
      %744 = vmatpush2.xpose.msra.mxu0 0.0
      %745 = vmatprep.subr.mxu0 0.0
      %746 = vmatpush2.xpose.msra.mxu0 0.0
      %747 = vmatprep.subr.mxu0 0.0
      %748 = vmatpush2.xpose.msra.mxu0 0.0
      %749 = vmatprep.subr.mxu0 0.0
      %750 = vmatpush2.xpose.msra.mxu0 0.0
      %751 = vmatprep.subr.mxu0 0.0
      %752 = vmatpush2.xpose.msra.mxu0 0.0
      %753 = vmatprep.subr.mxu0 0.0
      %754 = vmatpush2.xpose.msra.mxu0 0.0
      %755 = vmatprep.subr.mxu0 0.0
      %756 = vmatpush2.xpose.msra.mxu0 0.0
      %757 = vmatprep.subr.mxu0 0.0
      %758 = vmatpush2.xpose.msra.mxu0 0.0
      %759 = vmatprep.subr.mxu0 0.0
      %760 = vmatpush2.xpose.msra.mxu0 0.0
      %761 = vmatprep.subr.mxu0 0.0
      %762 = vmatpush2.xpose.msra.mxu0 0.0
      %763 = vmatprep.subr.mxu0 0.0
      %764 = vmatpush2.xpose.msra.mxu0 0.0
      %765 = vmatprep.mubr.f32.mxu0 0.0
      %766 = vmatmul.mubr.f32.gmra.mxu0 %v697
      %v767 = vpop.f32.mrf.mxu0
      %v768 = vadd.f32 0.0, %v767
      %v769 = vpop.f32.mrf.mxu0
      %770 = vdwg.mxu0
      %771 = vset.pattern.permute.xlu0 27
      %772 = vperm.xlu0 %771, %v139
      %v773 = vpop.permute.xlu0 %772
      %v775 = vlaneseq
      %v776 = vshrl.u32 %v775, 7
      %v777 = vsub.s32 0, %v776
      %v778 = vrot.slane %v140, %v777
      %v779 = vsub.f32 %v773, %v778
      %v780 = vand.u32 2147483647, %v779
      %vm781 = vcmp.lt.f32.partialorder %v780, 0.5
      %v782 = vsel %vm781, 1, 0
      %v783 = vcvt.s32.f32 %v782
      %v784 = vmax.f32 %v768, 0.0
      %v785 = vand.u32 2147483647, %v768
      %v786 = vsub.f32 0.0, %v785
      %v787 = vmul.f32 %v786, 1.442695
      %v788 = vpow.pop %v787
      %v789 = vadd.f32 %v788, 1.0
      %v790 = vlog2.pop %v789
      %v791 = vmul.f32 %v790, 0.6931472
      %v792 = vmul.f32 -0.5, %v788
      %v793 = vadd.f32 %v792, 1.0
      %v794 = vmul.f32 %v793, %v788
      %v795 = vand.u32 2147483647, %v788
      %vm796 = vcmp.lt.f32.partialorder %v795, 0.0004427343
      %v797 = vsel %vm796, %v794, %v791
      %v798 = vadd.f32 %v784, %v797
      %800 = vrot.lane.b32.xlu0 %v798, 28
      %v801 = vpop.permute.xlu0 %800
      %v803 = vmul.f32 %v783, %v801
      %805 = vrot.lane.b32.xlu0 %v803, 100
      %v806 = vpop.permute.xlu0 %805
      %v808 = vsel %vm363, %v806, 0.0
      %809 = vadd.xlane.f32.xlu0 %v808
      %v810 = vpop.xlane.xlu0 %809
      %v811 = vadd.f32 %v695, 1e-16
      %v812 = vlog2.pop %v811
      %v813 = vmul.f32 %v812, 0.6931472
      %v814 = vadd.f32 %v810, 1e-16
      %v815 = vlog2.pop %v814
      %v816 = vmul.f32 %v815, 0.6931472
      %v817 = vsub.f32 %v813, %v816
      %v818 = vmul.f32 %v581, 0.01
      %v819 = vmul.f32 %v817, 2.0
      %v820 = vsub.f32 %v818, %v819
      %v821 = vsel %vm553, %v820, 0.0
      %822 = vadd.xlane.f32.xlu0 %v821
      %v823 = vpop.xlane.xlu0 %822
      %v824 = vrot.slane %v823, 4
      %v825 = vadd.f32 %v823, %v824
      %v826 = vrot.slane %v825, 2
      %v827 = vadd.f32 %v825, %v826
      %v828 = vrot.slane %v827, 1
      %v829 = vadd.f32 %v827, %v828
      %s830 = vtos %v829
      %v831 = vrcp.pop 8.0
      %s832 = vtos %v831
      %s833 = smul.f32 %s830, %s832
      %s834 = sadd.f32 %s566, %s833
      %v835 = vlaneseq
      %v836 = vand.u32 %v835, 127
      %vm837 = vcmp.eq.s32.totalorder %v836, 0
      %vm838 = vcmp.eq.s32.totalorder %v836, 1
      %vm839 = vcmp.eq.s32.totalorder %v836, 2
      %v840 = vstv %s834
      %v841 = vsel %vm839, %v840, 0.0
      %843 = vset.pattern.permute.xlu0 0
      %844 = vperm.xlu0 %843, %v528
      %v845 = vpop.permute.xlu0 %844
      %v847 = vsel %vm838, %v845, %v841
      %v848 = vsel %vm837, %v820, %v847
      %849 = vst [vmem:[%s138] sm:$0xff] %v848
      %p850 = scmp.lt.s32.totalorder %s13, 3
      %s851 = scalar_select %p850, %s13, 3
      %s852 = smul.addr %s851, 8
      %s853 = scalar_lea.vmem %s2, %s852
      // Predicated region
      $region29: #{cvae_forward.1} parent=27 // pred_check
        %p854 = pneg %p78
      $region30: #{cvae_forward.1} parent=27 // pred_check_branch
        %856 = sbr.rel (%p854) target = $region32
      $region31: #{cvae_forward.1} parent=27 // pred_region
        _
      $region32: #{cvae_forward.1} parent=27 // pred_fallthru
        _
    $region28: #{cvae_forward.1} parent=5 // pred_fallthru
      _
    %p857 = scmp.le.s32.totalorder 2, %s8
    // Predicated region
    $region33: #{cvae_forward.1} parent=5 // pred_check
      %p858 = pneg %p857
    $region34: #{cvae_forward.1} parent=5 // pred_check_branch
      %860 = sbr.rel (%p858) target = $region36
    $region35: #{cvae_forward.1} parent=5 // pred_region
      %s861 = ssub.s32 %s8, 2
      // Predicated region
      $region37: #{cvae_forward.1} parent=35 // pred_check
        %p862 = pneg %p84
      $region38: #{cvae_forward.1} parent=35 // pred_check_branch
        %864 = sbr.rel (%p862) target = $region40
      $region39: #{cvae_forward.1} parent=35 // pred_region
        %p865 = scmp.lt.s32.totalorder %s14, 3
        %s866 = scalar_select %p865, %s14, 3
        %s867 = smul.addr %s866, 8
        %s868 = scalar_lea.vmem %s2, %s867
      $region40: #{cvae_forward.1} parent=35 // pred_fallthru
        _
    $region36: #{cvae_forward.1} parent=5 // pred_fallthru
      _
  $region6: #{cvae_forward.1} parent=0 // loop_footer
    %s12 = sadd.s32 1, %s8
  $region7: #{cvae_forward.1} parent=0 // loop_footer_branch
    %7 = sbr.rel target = $region3
  $region8: #{cvae_forward.1} parent=0 // loop_exit
    _

</llo_original>
